<compile_context>
chip_gen: v7x
topology: tpu7x:2x2x1
jax: 0.10.0
libtpu: 0.0.40
codegen_flags: <defaults>
</compile_context>

<pallas_src>
import numpy as np
import jax
import jax.numpy as jnp
from jax import lax
from jax.experimental import pallas as pl
from jax.experimental.pallas import tpu as pltpu


# ----------------------------------------------------------------------------
# Kernel 1: fused [Conv1d(same) + folded-BN + ReLU] x n_layers, NTC layout,
#           im2col bf16 MXU matmul per layer.
# ----------------------------------------------------------------------------
def conv_stack_kernel(x_ref, w_ref, shift_ref, out_ref, xp_ref):
    # x_ref    : (1, T, E)    f32, one batch element, NTC
    # w_ref    : (L, K*E, E)  bf16, BN-scale-folded im2col taps
    # shift_ref: (L, 1, E)    f32, beta - mean * scale
    # out_ref  : (1, T, E)    bf16 (feeds the LSTM's bf16 matmul directly)
    # xp_ref   : (T+K-1, E)   f32 scratch with zero halo rows
    T, E = x_ref.shape[1], x_ref.shape[2]
    L = shift_ref.shape[0]
    K = w_ref.shape[1] // E
    P = (K - 1) // 2

    # Zero only the 2*P halo rows; interior rows are fully overwritten below.
    xp_ref[0:P, :] = jnp.zeros((P, E), jnp.float32)
    xp_ref[T + P:T + 2 * P, :] = jnp.zeros((P, E), jnp.float32)

    act = x_ref[0]                                   # (T, E) f32, VMEM-resident
    for l in range(L):                               # static unroll over layers
        xp_ref[P:P + T, :] = act
        # im2col: one deep (T, K*E) @ (K*E, E) bf16 MXU matmul per layer.
        xcat = jnp.concatenate([xp_ref[k:k + T, :] for k in range(K)],
                               axis=1).astype(jnp.bfloat16)
        acc = jnp.dot(xcat, w_ref[l], preferred_element_type=jnp.float32)
        act = jnp.maximum(acc + shift_ref[l], 0.0)   # BN scale folded into w
        # dropout(p=0.5, training=False) == identity
    out_ref[0] = act.astype(out_ref.dtype)           # lane-dense (T, E) store


def conv_stack(x_nte, w_all, shift_all):
    """x_nte: (B, T, E) f32; w_all: (L, K*E, E) bf16; shift_all: (L, 1, E)."""
    B, T, E = x_nte.shape
    L = shift_all.shape[0]
    KE = w_all.shape[1]
    K = KE // E
    return pl.pallas_call(
        conv_stack_kernel,
        out_shape=jax.ShapeDtypeStruct((B, T, E), jnp.bfloat16),
        grid_spec=pltpu.PrefetchScalarGridSpec(
            num_scalar_prefetch=0,
            grid=(B,),
            in_specs=[
                pl.BlockSpec((1, T, E), lambda b: (b, 0, 0)),
                pl.BlockSpec((L, KE, E), lambda b: (0, 0, 0)),
                pl.BlockSpec((L, 1, E), lambda b: (0, 0, 0)),
            ],
            out_specs=pl.BlockSpec((1, T, E), lambda b: (b, 0, 0)),
            scratch_shapes=[pltpu.VMEM((T + K - 1, E), jnp.float32)],
        ),
        compiler_params=pltpu.CompilerParams(
            dimension_semantics=("parallel",)),
    )(x_nte, w_all, shift_all)


# ----------------------------------------------------------------------------
# Kernel 2: batched, direction-interleaved bidirectional LSTM
#           (pack_padded_sequence semantics via per-row length masking)
# ----------------------------------------------------------------------------
def bilstm_kernel(lmax_ref,                 # scalar-prefetch: (1,) max length
                  x_ref,                    # (T*Bp, E)  bf16, time-major rows
                  wih_ref,                  # (E, 8H)    bf16 [fwd 4H | bwd 4H]
                  whh_ref,                  # (2H, 8H)   f32 block-diagonal
                  b_ref,                    # (1, 8H)    f32 combined biases
                  len_ref,                  # (Bp, 1)    int32 lengths (0 = pad)
                  out_ref,                  # (T*Bp, 2H) f32 time-major rows
                  xg_ref):                  # (T*Bp, 8H) f32 scratch: x-gates
    H8 = xg_ref.shape[1]
    H4 = H8 // 2
    H = H4 // 4
    Bp = len_ref.shape[0]
    H2 = out_ref.shape[1]
    T = out_ref.shape[0] // Bp
    Lmax = lmax_ref[0]

    # One bf16 MXU matmul for both directions' input-to-gate projections,
    # written directly into a single shared scratch (no extra temp/copy).
    xg_ref[...] = jnp.dot(x_ref[...], wih_ref[...],
                          preferred_element_type=jnp.float32) + b_ref[...]

    lens = len_ref[...]                     # (Bp, 1) int32
    whh = whh_ref[...]                      # (2H, 8H) f32 block-diagonal

    # Zero only the tail rows (t >= Lmax); rows t < Lmax are fully written
    # (masked) inside the recurrence loop.
    def zero_tail(t, carry):
        off = pl.multiple_of(t * Bp, 8)
        out_ref[pl.ds(off, Bp), :] = jnp.zeros((Bp, H2), jnp.float32)
        return carry
    lax.fori_loop(Lmax, T, zero_tail, 0)

    def cell(g, c):                         # g: (Bp, 4H), c: (Bp, H)
        i_g = jax.nn.sigmoid(g[:, 0:H])
        f_g = jax.nn.sigmoid(g[:, H:2 * H])
        g_g = jnp.tanh(g[:, 2 * H:3 * H])
        o_g = jax.nn.sigmoid(g[:, 3 * H:4 * H])
        c_new = f_g * c + i_g * g_g
        h_new = o_g * jnp.tanh(c_new)
        return h_new, c_new

    def step(idx, carry):
        hf, cf, hb, cb = carry
        tf = idx                            # forward time index
        tb = Lmax - 1 - idx                 # backward time index
        off_f = pl.multiple_of(tf * Bp, 8)  # aligned (Bp, .) slabs
        off_b = pl.multiple_of(tb * Bp, 8)

        # Single fused recurrent matmul (block-diagonal W_hh): one MXU
        # push/pop per step on the serial critical path instead of two.
        # TODO(synk): hold whh resident via pltpu.matmul_push_rhs.
        hcat = jnp.concatenate([hf, hb], axis=1)                  # (Bp, 2H)
        rec = jnp.dot(hcat, whh, preferred_element_type=jnp.float32)

        gf = xg_ref[pl.ds(off_f, Bp), 0:H4] + rec[:, 0:H4]
        gb = xg_ref[pl.ds(off_b, Bp), H4:H8] + rec[:, H4:H8]
        hf_new, cf_new = cell(gf, cf)
        hb_new, cb_new = cell(gb, cb)

        vf = tf < lens                      # (Bp, 1) per-row validity masks
        vb = tb < lens
        hf = jnp.where(vf, hf_new, hf)
        cf = jnp.where(vf, cf_new, cf)
        hb = jnp.where(vb, hb_new, hb)
        cb = jnp.where(vb, cb_new, cb)

        out_ref[pl.ds(off_f, Bp), 0:H] = jnp.where(vf, hf_new, 0.0)
        out_ref[pl.ds(off_b, Bp), H:2 * H] = jnp.where(vb, hb_new, 0.0)
        return (hf, cf, hb, cb)

    z = jnp.zeros((Bp, H), jnp.float32)
    lax.fori_loop(0, Lmax, step, (z, z, z, z))


def bilstm(x_bte, lengths, wih_cat, whh_bd, b_cat, H):
    """x_bte: (B, T, E) bf16; lengths: (B,) int. Returns (B, T, 2H) f32."""
    B, T, E = x_bte.shape
    Bp = ((B + 7) // 8) * 8                 # pad batch to a sublane multiple

    # One fused glue pass: NTC -> time-major, pad batch rows, stay bf16.
    x_tm = jnp.zeros((T, Bp, E), x_bte.dtype)
    x_tm = x_tm.at[:, :B, :].set(jnp.transpose(x_bte, (1, 0, 2)))
    x_tm = x_tm.reshape(T * Bp, E)

    len_col = jnp.zeros((Bp, 1), jnp.int32)
    len_col = len_col.at[:B, 0].set(lengths.astype(jnp.int32))
    lmax = jnp.max(lengths).astype(jnp.int32).reshape(1)

    out_tm = pl.pallas_call(
        bilstm_kernel,
        out_shape=jax.ShapeDtypeStruct((T * Bp, 2 * H), jnp.float32),
        grid_spec=pltpu.PrefetchScalarGridSpec(
            num_scalar_prefetch=1,
            grid=(1,),
            in_specs=[
                pl.BlockSpec((T * Bp, E), lambda i, lm: (0, 0)),
                pl.BlockSpec((E, 8 * H), lambda i, lm: (0, 0)),
                pl.BlockSpec((2 * H, 8 * H), lambda i, lm: (0, 0)),
                pl.BlockSpec((1, 8 * H), lambda i, lm: (0, 0)),
                pl.BlockSpec((Bp, 1), lambda i, lm: (0, 0)),
            ],
            out_specs=pl.BlockSpec((T * Bp, 2 * H), lambda i, lm: (0, 0)),
            scratch_shapes=[pltpu.VMEM((T * Bp, 8 * H), jnp.float32)],
        ),
        compiler_params=pltpu.CompilerParams(
            dimension_semantics=("arbitrary",)),
    )(lmax, x_tm, wih_cat, whh_bd, b_cat, len_col)

    out = out_tm.reshape(T, Bp, 2 * H)[:, :B, :]
    return jnp.transpose(out, (1, 0, 2))


# ----------------------------------------------------------------------------
# Encoder wrapper (parameter packing + layout glue in plain JAX)
# ----------------------------------------------------------------------------
def encoder_forward(x_nct, lengths, conv_params, lstm_params):
    """x_nct: (B, E, T) like PyTorch. Returns (B, T, E) float32."""
    eps = 1e-5
    w_list, shift_list = [], []
    for (w, gamma, beta, mean, var) in conv_params:
        scale = gamma / jnp.sqrt(var + eps)                 # (E_out,)
        shift = beta - mean * scale
        wt = jnp.transpose(w, (2, 1, 0)) * scale[None, None, :]  # (K, Ein, Eout)
        K, E_in, E_out = wt.shape
        w_list.append(wt.reshape(K * E_in, E_out))          # im2col layout
        shift_list.append(shift)
    w_all = jnp.stack(w_list).astype(jnp.bfloat16)           # (L, K*E, E)
    shift_all = jnp.stack(shift_list)[:, None, :]            # (L, 1, E) f32

    x_nte = jnp.transpose(x_nct, (0, 2, 1))                  # NCT -> NTC once
    y_nte = conv_stack(x_nte, w_all, shift_all)              # (B, T, E) bf16

    wih_f, whh_f, bih_f, bhh_f, wih_b, whh_b, bih_b, bhh_b = lstm_params
    H = whh_f.shape[1]
    wih_cat = jnp.concatenate([wih_f.T, wih_b.T], axis=1).astype(jnp.bfloat16)
    b_cat = jnp.concatenate([bih_f + bhh_f, bih_b + bhh_b])[None, :]  # (1, 8H)
    whh_bd = jnp.zeros((2 * H, 8 * H), jnp.float32)           # block-diagonal
    whh_bd = whh_bd.at[:H, :4 * H].set(whh_f.T)
    whh_bd = whh_bd.at[H:, 4 * H:].set(whh_b.T)
    return bilstm(y_nte, lengths, wih_cat, whh_bd, b_cat, H)


# ----------------------------------------------------------------------------
# Pure-JAX f32 reference (for verification)
# ----------------------------------------------------------------------------
def encoder_reference(x, lengths_np, conv_params, lstm_params):
    B, E, T = x.shape
    eps = 1e-5
    for (w, gamma, beta, mean, var) in conv_params:
        K = w.shape[2]
        P = (K - 1) // 2
        xp = jnp.pad(x, ((0, 0), (0, 0), (P, P)))
        y = jnp.zeros((B, E, T), jnp.float32)
        for k in range(K):
            y = y + jnp.einsum('oi,bit->bot', w[:, :, k], xp[:, :, k:k + T])
        scale = gamma / jnp.sqrt(var + eps)
        shift = beta - mean * scale
        x = jnp.maximum(y * scale[None, :, None] + shift[None, :, None], 0.0)
    xt = jnp.transpose(x, (0, 2, 1))  # (B, T, E)

    wih_f, whh_f, bih_f, bhh_f, wih_b, whh_b, bih_b, bhh_b = lstm_params
    H = whh_f.shape[1]

    def cell(g, c):
        i = jax.nn.sigmoid(g[0:H])
        f = jax.nn.sigmoid(g[H:2 * H])
        gg = jnp.tanh(g[2 * H:3 * H])
        o = jax.nn.sigmoid(g[3 * H:4 * H])
        c = f * c + i * gg
        return o * jnp.tanh(c), c

    outs = []
    for bi in range(B):
        Lb = int(lengths_np[bi])
        seq = xt[bi]
        fwd = [jnp.zeros((H,), jnp.float32) for _ in range(T)]
        h = jnp.zeros((H,), jnp.float32)
        c = jnp.zeros((H,), jnp.float32)
        for t in range(T):
            if t < Lb:
                g = wih_f @ seq[t] + bih_f + whh_f @ h + bhh_f
                h, c = cell(g, c)
                fwd[t] = h
        bwd = [jnp.zeros((H,), jnp.float32) for _ in range(T)]
        h = jnp.zeros((H,), jnp.float32)
        c = jnp.zeros((H,), jnp.float32)
        for t in range(T - 1, -1, -1):
            if t < Lb:
                g = wih_b @ seq[t] + bih_b + whh_b @ h + bhh_b
                h, c = cell(g, c)
                bwd[t] = h
        outs.append(jnp.concatenate(
            [jnp.stack(fwd), jnp.stack(bwd)], axis=-1))
    return jnp.stack(outs)


# ----------------------------------------------------------------------------
if __name__ == "__main__":
    # Small hparams: encoder_embedding_dim=32, kernel_size=5, n_convolutions=3
    B, E, T, K, NCONV = 2, 32, 16, 5, 3
    H = E // 2

    key = jax.random.PRNGKey(0)
    keys = iter(jax.random.split(key, 64))

    conv_params = []
    for _ in range(NCONV):
        w = 0.1 * jax.random.normal(next(keys), (E, E, K), jnp.float32)
        gamma = 1.0 + 0.1 * jax.random.normal(next(keys), (E,), jnp.float32)
        beta = 0.1 * jax.random.normal(next(keys), (E,), jnp.float32)
        mean = 0.1 * jax.random.normal(next(keys), (E,), jnp.float32)
        var = 1.0 + 0.1 * jnp.abs(jax.random.normal(next(keys), (E,),
                                                    jnp.float32))
        conv_params.append((w, gamma, beta, mean, var))

    def lstm_w(shape):
        return 0.1 * jax.random.normal(next(keys), shape, jnp.float32)

    lstm_params = (
        lstm_w((4 * H, E)), lstm_w((4 * H, H)),       # forward W_ih, W_hh
        lstm_w((4 * H,)), lstm_w((4 * H,)),           # forward b_ih, b_hh
        lstm_w((4 * H, E)), lstm_w((4 * H, H)),       # reverse W_ih, W_hh
        lstm_w((4 * H,)), lstm_w((4 * H,)),           # reverse b_ih, b_hh
    )

    x = jax.random.normal(next(keys), (B, E, T), jnp.float32)   # NCT input
    lengths_np = np.array([T, T - 5], dtype=np.int32)           # descending
    lengths = jnp.asarray(lengths_np)

    out = encoder_forward(x, lengths, conv_params, lstm_params)
    out = jax.block_until_ready(out)

    ref = encoder_reference(x, lengths_np, conv_params, lstm_params)
    ref = jax.block_until_ready(ref)

    # Tolerance loosened vs the f32-only version because MXU matmuls now run
    # with bf16 operands (f32 accumulation, f32 h/c carries).
    np.testing.assert_allclose(np.asarray(out), np.asarray(ref),
                               rtol=5e-2, atol=5e-2)
    print("KERNEL_OK")
</pallas_src>

<mosaic_0001>
module attributes {stable_mosaic.version = 11 : i64} {
  func.func @conv_stack_kernel(%arg0: i32, %arg1: memref<1x16x32xf32, #tpu.memory_space<vmem>>, %arg2: memref<3x160x32xbf16, #tpu.memory_space<vmem>>, %arg3: memref<3x1x32xf32, #tpu.memory_space<vmem>>, %arg4: memref<1x16x32xbf16, #tpu.memory_space<vmem>>, %arg5: memref<20x32xf32, #tpu.memory_space<vmem>>) attributes {dimension_semantics = [#tpu.dimension_semantics<parallel>], iteration_bounds = array<i64: 2>, scalar_prefetch = 0 : i64, scratch_operands = 1 : i64, tpu.core_type = #tpu.core_type<tc>, window_params = [{transform_indices = @transform_0, window_bounds = array<i64: 1, 16, 32>}, {pipeline_mode = #tpu.pipeline_mode<synchronous>, transform_indices = @transform_1, window_bounds = array<i64: 3, 160, 32>}, {pipeline_mode = #tpu.pipeline_mode<synchronous>, transform_indices = @transform_2, window_bounds = array<i64: 3, 1, 32>}, {transform_indices = @transform_3, window_bounds = array<i64: 1, 16, 32>}]} {
    %cst = arith.constant 0.000000e+00 : f32
    %0 = vector.broadcast %cst : f32 to vector<2x32xf32>
    %c0 = arith.constant 0 : index
    %c0_0 = arith.constant 0 : index
    %1 = vector.load %arg5[%c0, %c0_0] : memref<20x32xf32, #tpu.memory_space<vmem>>, vector<2x32xf32>
    tpu.vector_store %arg5[%c0, %c0_0], %0 {strides = array<i32>} : memref<20x32xf32, #tpu.memory_space<vmem>>, vector<2x32xf32>,
    %cst_1 = arith.constant 0.000000e+00 : f32
    %2 = vector.broadcast %cst_1 : f32 to vector<2x32xf32>
    %c18 = arith.constant 18 : index
    %c0_2 = arith.constant 0 : index
    %3 = vector.load %arg5[%c18, %c0_2] : memref<20x32xf32, #tpu.memory_space<vmem>>, vector<2x32xf32>
    tpu.vector_store %arg5[%c18, %c0_2], %2 {strides = array<i32>} : memref<20x32xf32, #tpu.memory_space<vmem>>, vector<2x32xf32>,
    %c0_3 = arith.constant 0 : index
    %c0_4 = arith.constant 0 : index
    %c0_5 = arith.constant 0 : index
    %4 = vector.load %arg1[%c0_3, %c0_4, %c0_5] : memref<1x16x32xf32, #tpu.memory_space<vmem>>, vector<1x16x32xf32>
    %5 = vector.shape_cast %4 : vector<1x16x32xf32> to vector<16x32xf32>
    %c2 = arith.constant 2 : index
    %c0_6 = arith.constant 0 : index
    %6 = vector.load %arg5[%c2, %c0_6] : memref<20x32xf32, #tpu.memory_space<vmem>>, vector<16x32xf32>
    tpu.vector_store %arg5[%c2, %c0_6], %5 {strides = array<i32>} : memref<20x32xf32, #tpu.memory_space<vmem>>, vector<16x32xf32>,
    %c0_7 = arith.constant 0 : index
    %c0_8 = arith.constant 0 : index
    %7 = vector.load %arg5[%c0_7, %c0_8] : memref<20x32xf32, #tpu.memory_space<vmem>>, vector<16x32xf32>
    %c1 = arith.constant 1 : index
    %c0_9 = arith.constant 0 : index
    %8 = vector.load %arg5[%c1, %c0_9] : memref<20x32xf32, #tpu.memory_space<vmem>>, vector<16x32xf32>
    %c2_10 = arith.constant 2 : index
    %c0_11 = arith.constant 0 : index
    %9 = vector.load %arg5[%c2_10, %c0_11] : memref<20x32xf32, #tpu.memory_space<vmem>>, vector<16x32xf32>
    %c3 = arith.constant 3 : index
    %c0_12 = arith.constant 0 : index
    %10 = vector.load %arg5[%c3, %c0_12] : memref<20x32xf32, #tpu.memory_space<vmem>>, vector<16x32xf32>
    %c4 = arith.constant 4 : index
    %c0_13 = arith.constant 0 : index
    %11 = vector.load %arg5[%c4, %c0_13] : memref<20x32xf32, #tpu.memory_space<vmem>>, vector<16x32xf32>
    %12 = tpu.concatenate %7, %8, %9, %10, %11 in 1 : vector<16x32xf32>, vector<16x32xf32>, vector<16x32xf32>, vector<16x32xf32>, vector<16x32xf32> -> vector<16x160xf32>
    %13 = arith.truncf %12 : vector<16x160xf32> to vector<16x160xbf16>
    %c0_14 = arith.constant 0 : index
    %c0_15 = arith.constant 0 : index
    %c0_16 = arith.constant 0 : index
    %14 = vector.load %arg2[%c0_14, %c0_15, %c0_16] : memref<3x160x32xbf16, #tpu.memory_space<vmem>>, vector<1x160x32xbf16>
    %15 = vector.shape_cast %14 : vector<1x160x32xbf16> to vector<160x32xbf16>
    %cst_17 = arith.constant dense<0.000000e+00> : vector<16x32xf32>
    %16 = tpu.matmul %13, %15, %cst_17 {dimension_numbers = #tpu.dot_dimension_numbers<[1], [0], [0], [1], [0, 0, 1, 1], [], []>} : vector<16x160xbf16>, vector<160x32xbf16>, vector<16x32xf32> -> vector<16x32xf32>
    %c0_18 = arith.constant 0 : index
    %c0_19 = arith.constant 0 : index
    %c0_20 = arith.constant 0 : index
    %17 = vector.load %arg3[%c0_18, %c0_19, %c0_20] : memref<3x1x32xf32, #tpu.memory_space<vmem>>, vector<1x1x32xf32>
    %18 = vector.shape_cast %17 : vector<1x1x32xf32> to vector<1x32xf32>
    %19 = vector.broadcast %18 : vector<1x32xf32> to vector<16x32xf32>
    %20 = arith.addf %16, %19 : vector<16x32xf32>
    %cst_21 = arith.constant 0.000000e+00 : f32
    %21 = vector.broadcast %cst_21 : f32 to vector<16x32xf32>
    %22 = arith.maximumf %20, %21 : vector<16x32xf32>
    %c2_22 = arith.constant 2 : index
    %c0_23 = arith.constant 0 : index
    %23 = vector.load %arg5[%c2_22, %c0_23] : memref<20x32xf32, #tpu.memory_space<vmem>>, vector<16x32xf32>
    tpu.vector_store %arg5[%c2_22, %c0_23], %22 {strides = array<i32>} : memref<20x32xf32, #tpu.memory_space<vmem>>, vector<16x32xf32>,
    %c0_24 = arith.constant 0 : index
    %c0_25 = arith.constant 0 : index
    %24 = vector.load %arg5[%c0_24, %c0_25] : memref<20x32xf32, #tpu.memory_space<vmem>>, vector<16x32xf32>
    %c1_26 = arith.constant 1 : index
    %c0_27 = arith.constant 0 : index
    %25 = vector.load %arg5[%c1_26, %c0_27] : memref<20x32xf32, #tpu.memory_space<vmem>>, vector<16x32xf32>
    %c2_28 = arith.constant 2 : index
    %c0_29 = arith.constant 0 : index
    %26 = vector.load %arg5[%c2_28, %c0_29] : memref<20x32xf32, #tpu.memory_space<vmem>>, vector<16x32xf32>
    %c3_30 = arith.constant 3 : index
    %c0_31 = arith.constant 0 : index
    %27 = vector.load %arg5[%c3_30, %c0_31] : memref<20x32xf32, #tpu.memory_space<vmem>>, vector<16x32xf32>
    %c4_32 = arith.constant 4 : index
    %c0_33 = arith.constant 0 : index
    %28 = vector.load %arg5[%c4_32, %c0_33] : memref<20x32xf32, #tpu.memory_space<vmem>>, vector<16x32xf32>
    %29 = tpu.concatenate %24, %25, %26, %27, %28 in 1 : vector<16x32xf32>, vector<16x32xf32>, vector<16x32xf32>, vector<16x32xf32>, vector<16x32xf32> -> vector<16x160xf32>
    %30 = arith.truncf %29 : vector<16x160xf32> to vector<16x160xbf16>
    %c1_34 = arith.constant 1 : index
    %c0_35 = arith.constant 0 : index
    %c0_36 = arith.constant 0 : index
    %31 = vector.load %arg2[%c1_34, %c0_35, %c0_36] : memref<3x160x32xbf16, #tpu.memory_space<vmem>>, vector<1x160x32xbf16>
    %32 = vector.shape_cast %31 : vector<1x160x32xbf16> to vector<160x32xbf16>
    %cst_37 = arith.constant dense<0.000000e+00> : vector<16x32xf32>
    %33 = tpu.matmul %30, %32, %cst_37 {dimension_numbers = #tpu.dot_dimension_numbers<[1], [0], [0], [1], [0, 0, 1, 1], [], []>} : vector<16x160xbf16>, vector<160x32xbf16>, vector<16x32xf32> -> vector<16x32xf32>
    %c1_38 = arith.constant 1 : index
    %c0_39 = arith.constant 0 : index
    %c0_40 = arith.constant 0 : index
    %34 = vector.load %arg3[%c1_38, %c0_39, %c0_40] : memref<3x1x32xf32, #tpu.memory_space<vmem>>, vector<1x1x32xf32>
    %35 = vector.shape_cast %34 : vector<1x1x32xf32> to vector<1x32xf32>
    %36 = vector.broadcast %35 : vector<1x32xf32> to vector<16x32xf32>
    %37 = arith.addf %33, %36 : vector<16x32xf32>
    %cst_41 = arith.constant 0.000000e+00 : f32
    %38 = vector.broadcast %cst_41 : f32 to vector<16x32xf32>
    %39 = arith.maximumf %37, %38 : vector<16x32xf32>
    %c2_42 = arith.constant 2 : index
    %c0_43 = arith.constant 0 : index
    %40 = vector.load %arg5[%c2_42, %c0_43] : memref<20x32xf32, #tpu.memory_space<vmem>>, vector<16x32xf32>
    tpu.vector_store %arg5[%c2_42, %c0_43], %39 {strides = array<i32>} : memref<20x32xf32, #tpu.memory_space<vmem>>, vector<16x32xf32>,
    %c0_44 = arith.constant 0 : index
    %c0_45 = arith.constant 0 : index
    %41 = vector.load %arg5[%c0_44, %c0_45] : memref<20x32xf32, #tpu.memory_space<vmem>>, vector<16x32xf32>
    %c1_46 = arith.constant 1 : index
    %c0_47 = arith.constant 0 : index
    %42 = vector.load %arg5[%c1_46, %c0_47] : memref<20x32xf32, #tpu.memory_space<vmem>>, vector<16x32xf32>
    %c2_48 = arith.constant 2 : index
    %c0_49 = arith.constant 0 : index
    %43 = vector.load %arg5[%c2_48, %c0_49] : memref<20x32xf32, #tpu.memory_space<vmem>>, vector<16x32xf32>
    %c3_50 = arith.constant 3 : index
    %c0_51 = arith.constant 0 : index
    %44 = vector.load %arg5[%c3_50, %c0_51] : memref<20x32xf32, #tpu.memory_space<vmem>>, vector<16x32xf32>
    %c4_52 = arith.constant 4 : index
    %c0_53 = arith.constant 0 : index
    %45 = vector.load %arg5[%c4_52, %c0_53] : memref<20x32xf32, #tpu.memory_space<vmem>>, vector<16x32xf32>
    %46 = tpu.concatenate %41, %42, %43, %44, %45 in 1 : vector<16x32xf32>, vector<16x32xf32>, vector<16x32xf32>, vector<16x32xf32>, vector<16x32xf32> -> vector<16x160xf32>
    %47 = arith.truncf %46 : vector<16x160xf32> to vector<16x160xbf16>
    %c2_54 = arith.constant 2 : index
    %c0_55 = arith.constant 0 : index
    %c0_56 = arith.constant 0 : index
    %48 = vector.load %arg2[%c2_54, %c0_55, %c0_56] : memref<3x160x32xbf16, #tpu.memory_space<vmem>>, vector<1x160x32xbf16>
    %49 = vector.shape_cast %48 : vector<1x160x32xbf16> to vector<160x32xbf16>
    %cst_57 = arith.constant dense<0.000000e+00> : vector<16x32xf32>
    %50 = tpu.matmul %47, %49, %cst_57 {dimension_numbers = #tpu.dot_dimension_numbers<[1], [0], [0], [1], [0, 0, 1, 1], [], []>} : vector<16x160xbf16>, vector<160x32xbf16>, vector<16x32xf32> -> vector<16x32xf32>
    %c2_58 = arith.constant 2 : index
    %c0_59 = arith.constant 0 : index
    %c0_60 = arith.constant 0 : index
    %51 = vector.load %arg3[%c2_58, %c0_59, %c0_60] : memref<3x1x32xf32, #tpu.memory_space<vmem>>, vector<1x1x32xf32>
    %52 = vector.shape_cast %51 : vector<1x1x32xf32> to vector<1x32xf32>
    %53 = vector.broadcast %52 : vector<1x32xf32> to vector<16x32xf32>
    %54 = arith.addf %50, %53 : vector<16x32xf32>
    %cst_61 = arith.constant 0.000000e+00 : f32
    %55 = vector.broadcast %cst_61 : f32 to vector<16x32xf32>
    %56 = arith.maximumf %54, %55 : vector<16x32xf32>
    %57 = arith.truncf %56 : vector<16x32xf32> to vector<16x32xbf16>
    %c0_62 = arith.constant 0 : index
    %c0_63 = arith.constant 0 : index
    %c0_64 = arith.constant 0 : index
    %58 = vector.load %arg4[%c0_62, %c0_63, %c0_64] : memref<1x16x32xbf16, #tpu.memory_space<vmem>>, vector<1x16x32xbf16>
    %59 = vector.shape_cast %58 : vector<1x16x32xbf16> to vector<16x32xbf16>
    %60 = vector.shape_cast %57 : vector<16x32xbf16> to vector<1x16x32xbf16>
    tpu.vector_store %arg4[%c0_62, %c0_63, %c0_64], %60 {strides = array<i32>} : memref<1x16x32xbf16, #tpu.memory_space<vmem>>, vector<1x16x32xbf16>,
    return
  }
  func.func @transform_0(%arg0: i32) -> (i32, i32, i32) {
    %c0_i32 = arith.constant 0 : i32
    %c0_i32_0 = arith.constant 0 : i32
    %c0_i32_1 = arith.constant 0 : i32
    return %arg0, %c0_i32, %c0_i32_0 : i32, i32, i32
  }
  func.func @transform_1(%arg0: i32) -> (i32, i32, i32) {
    %c0_i32 = arith.constant 0 : i32
    %c0_i32_0 = arith.constant 0 : i32
    %c0_i32_1 = arith.constant 0 : i32
    %c0_i32_2 = arith.constant 0 : i32
    return %c0_i32, %c0_i32_0, %c0_i32_1 : i32, i32, i32
  }
  func.func @transform_2(%arg0: i32) -> (i32, i32, i32) {
    %c0_i32 = arith.constant 0 : i32
    %c0_i32_0 = arith.constant 0 : i32
    %c0_i32_1 = arith.constant 0 : i32
    %c0_i32_2 = arith.constant 0 : i32
    return %c0_i32, %c0_i32_0, %c0_i32_1 : i32, i32, i32
  }
  func.func @transform_3(%arg0: i32) -> (i32, i32, i32) {
    %c0_i32 = arith.constant 0 : i32
    %c0_i32_0 = arith.constant 0 : i32
    %c0_i32_1 = arith.constant 0 : i32
    return %arg0, %c0_i32, %c0_i32_0 : i32, i32, i32
  }
}

</mosaic_0001>

<llo_original>
// kernel: tpu_custom_call.1
$region0: #{tpu_custom_call.1}
  #allocation0 [shape = 'u32[]', space=smem, size = 0x4, offset = 0x4, fixed_abs, tag = 'smem constant byte address 0x4 - core index']
  #allocation1 [shape = 'u32[144,128]{1,0:T(1,128)}', space=vmem, size = 0x12000, scoped, tag = 'internal scratch']
  #allocation2 [shape = 'f32[20,32]{1,0:T(8,128)}', space=vmem, size = 0x3000, scoped, tag = 'scratch operand']
  %s0 = inlined_call_operand.vmem [shape: f32[2,16,32], index: 0, kind: input, shape index: {}]
  %s1 = inlined_call_operand.vmem [shape: bf16[3,160,32], index: 1, kind: input, shape index: {}]
  %s2 = inlined_call_operand.vmem [shape: f32[3,1,32], index: 2, kind: input, shape index: {}]
  %s3 = inlined_call_operand.hbm [shape: bf16[2,16,32], index: 3, kind: output, shape index: {}]
  %s4 = sld [smem:[#allocation0]]
  $region45: #{tpu_custom_call.1} parent=0
    _
  %s6 = ssub.s32 1, %s4
  %s7 = scalar_select 0, %s6, %s4
  $region1: #{tpu_custom_call.1} parent=0
    #allocation3 [shape = 'u8[8192]{0}', space=vmem, size = 0x2000, scoped, tag = 'output window, operand 0']
    #allocation4 [shape = 's32[2]{0}', space=sflag, size = 0x8, scoped, tag = 'scoped memory for tpu_custom_call.1']
    %8 = vsyncpa [#allocation4], 0
    %s9 = scalar_lea.sflag [#allocation4], 1
    %10 = vsyncpa %s9, 0
    loop: start=0, step=1, limit=4
    $region2: #{tpu_custom_call.1} parent=1 // loop_pre_header
      _
    $region3: #{tpu_custom_call.1} parent=1 // loop_header
      %s12 = sphi 0, %s16
      %p13 = scmp.ge.s32.totalorder %s12, 4
      %s22 = sphi 0, %s24
      %s25 = sphi 0, %s22
      %s26 = sphi 0, %s25
      %s42 = sphi 0, %s26
      %s46 = sphi 0, %s46
      %s48 = sphi 0, %s46
      %s49 = sphi 0, %s48
      %s63 = sphi 0, %s49
      %s67 = sphi 0, %s67
      %s69 = sphi 0, %s67
      %s70 = sphi 0, %s69
      %s84 = sphi 0, %s70
      %s90 = sphi 0, %s92
      %s93 = sphi 0, %s90
      %s94 = sphi 0, %s93
      %s110 = sphi 0, %s94
    $region4: #{tpu_custom_call.1} parent=1 // loop_header_branch
      %15 = sbr.rel (%p13) target = $region8
    $region5: #{tpu_custom_call.1} parent=1 // loop_body
      %s17 = ssub.s32 %s12, 1
      %s18 = ssub.s32 %s12, 2
      %s19 = sadd.s32 %s12, 1
      %s20 = ssub.s32 %s12, %s19
      %p21 = scmp.eq.s32.totalorder %s20, 0
      %s23 = sadd.s32 %s22, 1
      %s24 = scalar_select %p21, %s22, %s23
      %p27 = pneg %p21
      %p28 = scmp.eq.s32.totalorder %s12, 1
      %p29 = por %p27, %p28
      %p30 = scmp.ne.s32.totalorder %s22, %s25
      %p31 = scmp.eq.s32.totalorder %s12, 0
      %p32 = por %p30, %p31
      %p33 = scmp.ne.s32.totalorder %s22, %s25
      %p34 = scmp.eq.s32.totalorder %s17, 1
      %p35 = por %p33, %p34
      %p36 = scmp.ne.s32.totalorder %s25, %s26
      %p37 = scmp.eq.s32.totalorder %s17, 0
      %p38 = por %p36, %p37
      %p39 = scmp.ne.s32.totalorder %s25, %s26
      %p40 = scmp.eq.s32.totalorder %s18, 1
      %p41 = por %p39, %p40
      %p43 = scmp.ne.s32.totalorder %s26, %s42
      %p44 = scmp.eq.s32.totalorder %s18, 0
      %p45 = por %p43, %p44
      %s47 = sadd.s32 %s46, 1
      %p50 = scmp.eq.s32.totalorder %s12, 1
      %p51 = scmp.ne.s32.totalorder %s46, %s48
      %p52 = scmp.eq.s32.totalorder %s12, 0
      %p53 = por %p51, %p52
      %p54 = scmp.ne.s32.totalorder %s46, %s48
      %p55 = scmp.eq.s32.totalorder %s17, 1
      %p56 = por %p54, %p55
      %p57 = scmp.ne.s32.totalorder %s48, %s49
      %p58 = scmp.eq.s32.totalorder %s17, 0
      %p59 = por %p57, %p58
      %p60 = scmp.ne.s32.totalorder %s48, %s49
      %p61 = scmp.eq.s32.totalorder %s18, 1
      %p62 = por %p60, %p61
      %p64 = scmp.ne.s32.totalorder %s49, %s63
      %p65 = scmp.eq.s32.totalorder %s18, 0
      %p66 = por %p64, %p65
      %s68 = sadd.s32 %s67, 1
      %p71 = scmp.eq.s32.totalorder %s12, 1
      %p72 = scmp.ne.s32.totalorder %s67, %s69
      %p73 = scmp.eq.s32.totalorder %s12, 0
      %p74 = por %p72, %p73
      %p75 = scmp.ne.s32.totalorder %s67, %s69
      %p76 = scmp.eq.s32.totalorder %s17, 1
      %p77 = por %p75, %p76
      %p78 = scmp.ne.s32.totalorder %s69, %s70
      %p79 = scmp.eq.s32.totalorder %s17, 0
      %p80 = por %p78, %p79
      %p81 = scmp.ne.s32.totalorder %s69, %s70
      %p82 = scmp.eq.s32.totalorder %s18, 1
      %p83 = por %p81, %p82
      %p85 = scmp.ne.s32.totalorder %s70, %s84
      %p86 = scmp.eq.s32.totalorder %s18, 0
      %p87 = por %p85, %p86
      %s88 = ssub.s32 %s12, %s19
      %p89 = scmp.eq.s32.totalorder %s88, 0
      %s91 = sadd.s32 %s90, 1
      %s92 = scalar_select %p89, %s90, %s91
      %p95 = pneg %p89
      %p96 = scmp.eq.s32.totalorder %s12, 1
      %p97 = por %p95, %p96
      %p98 = scmp.ne.s32.totalorder %s90, %s93
      %p99 = scmp.eq.s32.totalorder %s12, 0
      %p100 = por %p98, %p99
      %p101 = scmp.ne.s32.totalorder %s90, %s93
      %p102 = scmp.eq.s32.totalorder %s17, 1
      %p103 = por %p101, %p102
      %p104 = scmp.ne.s32.totalorder %s93, %s94
      %p105 = scmp.eq.s32.totalorder %s17, 0
      %p106 = por %p104, %p105
      %p107 = scmp.ne.s32.totalorder %s93, %s94
      %p108 = scmp.eq.s32.totalorder %s18, 1
      %p109 = por %p107, %p108
      %p111 = scmp.ne.s32.totalorder %s94, %s110
      %p112 = scmp.eq.s32.totalorder %s18, 0
      %p113 = por %p111, %p112
      %p114 = scmp.le.s32.totalorder 1, %s12
      %p115 = scmp.lt.s32.totalorder %s12, 3
      %p116 = pnand %p114, %p115
      %p117 = pneg %p116
      // Predicated region
      $region9: #{tpu_custom_call.1} parent=5 // pred_check
        _
      $region10: #{tpu_custom_call.1} parent=5 // pred_check_branch
        %119 = sbr.rel (%p116) target = $region12
      $region11: #{tpu_custom_call.1} parent=5 // pred_region
        %s120 = ssub.s32 %s12, 1
        // Predicated region
        $region13: #{tpu_custom_call.1} parent=11 // pred_check
          %p121 = pneg %p59
        $region14: #{tpu_custom_call.1} parent=11 // pred_check_branch
          %123 = sbr.rel (%p121) target = $region16
        $region15: #{tpu_custom_call.1} parent=11 // pred_region
          _
        $region16: #{tpu_custom_call.1} parent=11 // pred_fallthru
          _
        // Predicated region
        $region17: #{tpu_custom_call.1} parent=11 // pred_check
          %p124 = pneg %p80
        $region18: #{tpu_custom_call.1} parent=11 // pred_check_branch
          %126 = sbr.rel (%p124) target = $region20
        $region19: #{tpu_custom_call.1} parent=11 // pred_region
          _
        $region20: #{tpu_custom_call.1} parent=11 // pred_fallthru
          _
      $region12: #{tpu_custom_call.1} parent=5 // pred_fallthru
        _
      %p127 = scmp.lt.s32.totalorder %s12, 2
      // Predicated region
      $region21: #{tpu_custom_call.1} parent=5 // pred_check
        %p128 = pneg %p127
      $region22: #{tpu_custom_call.1} parent=5 // pred_check_branch
        %130 = sbr.rel (%p128) target = $region24
      $region23: #{tpu_custom_call.1} parent=5 // pred_region
        // Predicated region
        $region25: #{tpu_custom_call.1} parent=23 // pred_check
          %p131 = pneg %p32
        $region26: #{tpu_custom_call.1} parent=23 // pred_check_branch
          %133 = sbr.rel (%p131) target = $region28
        $region27: #{tpu_custom_call.1} parent=23 // pred_region
          %p134 = scmp.lt.s32.totalorder %s12, 1
          %s135 = scalar_select %p134, %s12, 1
          %s136 = smul.addr %s135, 2
          %s137 = smul.addr %s136, 8
          %s138 = scalar_lea.vmem %s0, %s137
        $region28: #{tpu_custom_call.1} parent=23 // pred_fallthru
          _
      $region24: #{tpu_custom_call.1} parent=5 // pred_fallthru
        _
      %p139 = scmp.le.s32.totalorder 1, %s12
      %p140 = scmp.lt.s32.totalorder %s12, 3
      %p141 = pnand %p139, %p140
      %p142 = pneg %p141
      // Predicated region
      $region29: #{tpu_custom_call.1} parent=5 // pred_check
        _
      $region30: #{tpu_custom_call.1} parent=5 // pred_check_branch
        %144 = sbr.rel (%p141) target = $region32
      $region31: #{tpu_custom_call.1} parent=5 // pred_region
        %s145 = ssub.s32 %s12, 1
        %p146 = scmp.lt.s32.totalorder %s17, 1
        %s147 = scalar_select %p146, %s17, 1
        %s148 = smul.addr %s147, 2
        %s149 = smul.addr %s148, 8
        %s150 = scalar_lea.vmem %s0, %s149
        %p151 = pneg %p38
        %p152 = pneg %p35
        %p153 = pneg %p59
        %p154 = pneg %p56
        %p155 = pneg %p80
        %p156 = pneg %p77
        %p157 = pneg %p106
        %p158 = pneg %p103
        %s159 = sand.u32 %s93, 1
        %s160 = scalar_lea.sflag [#allocation4], %s159
        %s161 = sand.u32 %s93, 1
        %s162 = smul.addr %s161, 8
        %s163 = scalar_lea.vmem [#allocation3], %s162
        %p164 = scmp.lt.s32.totalorder %s17, 1
        %s165 = scalar_select %p164, %s17, 1
        %s166 = smul.addr %s165, 2
        %s167 = smul.addr %s166, 8
        %s168 = scalar_lea.vmem %s0, %s167
        %vm170 = vcmask 254976
        %171 = vst.msk [vmem:[#allocation2] sm:$0x3] %vm170, 0.0
        %172 = vst.msk [vmem:[#allocation2 + $0x12] sm:$0x3] %vm170, 0.0
        %v173 = vld [vmem:[%s168] sm:$0xff]
        %v174 = vld [vmem:[%s168 + $0x8] sm:$0xff]
        %vm175 = vcmask 261120
        %176 = vst.msk [vmem:[#allocation2 + $0x2] sm:$0xff] %vm175, %v173
        %177 = vst.msk [vmem:[#allocation2 + $0xa] sm:$0xff] %vm175, %v174
        %v178 = vld [vmem:[#allocation2] sm:$0xff]
        %v179 = vld [vmem:[#allocation2 + $0x8] sm:$0xff]
        %v180 = vld [vmem:[#allocation2 + $0x1] sm:$0xff]
        %v181 = vld [vmem:[#allocation2 + $0x9] sm:$0xff]
        %v182 = vld [vmem:[#allocation2 + $0x2] sm:$0xff]
        %v183 = vld [vmem:[#allocation2 + $0xa] sm:$0xff]
        %v184 = vld [vmem:[#allocation2 + $0x3] sm:$0xff]
        %v185 = vld [vmem:[#allocation2 + $0xb] sm:$0xff]
        %v186 = vld [vmem:[#allocation2 + $0x4] sm:$0xff]
        %v187 = vld [vmem:[#allocation2 + $0xc] sm:$0xff]
        %190 = vrot.lane.b32.xlu0 %v180, 32
        %v191 = vpop.permute.xlu0 %190
        %192 = vrot.lane.b32.xlu0 %v181, 32
        %v193 = vpop.permute.xlu0 %192
        %198 = vrot.lane.b32.xlu0 %v182, 64
        %v199 = vpop.permute.xlu0 %198
        %200 = vrot.lane.b32.xlu0 %v183, 64
        %v201 = vpop.permute.xlu0 %200
        %206 = vrot.lane.b32.xlu0 %v184, 96
        %v207 = vpop.permute.xlu0 %206
        %208 = vrot.lane.b32.xlu0 %v185, 96
        %v209 = vpop.permute.xlu0 %208
        %v212 = vsel %vm175, %v178, %v191
        %v213 = vsel %vm175, %v179, %v193
        %vm214 = vcmask 523264
        %v215 = vsel %vm214, %v212, %v199
        %v216 = vsel %vm214, %v213, %v201
        %vm217 = vcmask 785408
        %v218 = vsel %vm217, %v215, %v207
        %v219 = vsel %vm217, %v216, %v209
        %v220 = vpack.c.bf16 %v219, %v218
        %v221 = vpack.c.bf16 %v187, %v186
        %v222 = vld [vmem:[%s1] sm:$0xf]
        %v223 = vld [vmem:[%s1 + $0x4] sm:$0xf]
        %v224 = vld [vmem:[%s1 + $0x8] sm:$0xf]
        %v225 = vld [vmem:[%s1 + $0xc] sm:$0xf]
        %v226 = vld [vmem:[%s1 + $0x10] sm:$0xf]
        %v227 = vld [vmem:[%s1 + $0x14] sm:$0xf]
        %v228 = vld [vmem:[%s1 + $0x18] sm:$0xf]
        %v229 = vld [vmem:[%s1 + $0x1c] sm:$0xf]
        %v230 = vld [vmem:[%s1 + $0x20] sm:$0xf]
        %v231 = vld [vmem:[%s1 + $0x24] sm:$0xf]
        %v232 = vld [vmem:[%s1 + $0x28] sm:$0xf]
        %v233 = vld [vmem:[%s1 + $0x2c] sm:$0xf]
        %v234 = vld [vmem:[%s1 + $0x30] sm:$0xf]
        %v235 = vld [vmem:[%s1 + $0x34] sm:$0xf]
        %v236 = vld [vmem:[%s1 + $0x38] sm:$0xf]
        %v237 = vld [vmem:[%s1 + $0x3c] sm:$0xf]
        %v238 = vld [vmem:[%s1 + $0x40] sm:$0xf]
        %v239 = vld [vmem:[%s1 + $0x44] sm:$0xf]
        %v240 = vld [vmem:[%s1 + $0x48] sm:$0xf]
        %v241 = vld [vmem:[%s1 + $0x4c] sm:$0xf]
        %v242 = vld [vmem:[%s2] sm:$0x1]
        %v244 = vlaneseq
        %v245 = vshrl.u32 %v244, 7
        %v246 = vsub.s32 0, %v245
        %v247 = vrot.slane %v242, %v246
        %v269 = vunpack.c.l.b16 %v222
        %v270 = vunpack.c.l.b16 %v223
        %v271 = vunpack.c.l.b16 %v224
        %v272 = vunpack.c.l.b16 %v225
        %v273 = vunpack.c.l.b16 %v226
        %v274 = vunpack.c.l.b16 %v227
        %v275 = vunpack.c.l.b16 %v228
        %v276 = vunpack.c.l.b16 %v229
        %v277 = vunpack.c.l.b16 %v230
        %v278 = vunpack.c.l.b16 %v231
        %v279 = vunpack.c.l.b16 %v232
        %v280 = vunpack.c.l.b16 %v233
        %v281 = vunpack.c.l.b16 %v234
        %v282 = vunpack.c.l.b16 %v235
        %v283 = vunpack.c.l.b16 %v236
        %v284 = vunpack.c.l.b16 %v237
        %v285 = vunpack.c.l.b16 %v238
        %v286 = vunpack.c.l.b16 %v239
        %v287 = vunpack.c.l.b16 %v240
        %v288 = vunpack.c.l.b16 %v241
        %v289 = vpack.c.b16 %v270, %v269
        %v290 = vpack.c.b16 %v272, %v271
        %v291 = vpack.c.b16 %v274, %v273
        %v292 = vpack.c.b16 %v276, %v275
        %v293 = vpack.c.b16 %v278, %v277
        %v294 = vpack.c.b16 %v280, %v279
        %v295 = vpack.c.b16 %v282, %v281
        %v296 = vpack.c.b16 %v284, %v283
        %v297 = vpack.c.b16 %v286, %v285
        %v298 = vpack.c.b16 %v288, %v287
        %v310 = vsel %vm175, %v221, 0
        %312 = vmatprep.subr.bf16.mxu0 0
        %313 = vmatpush1.bf16.msra.mxu0 %v289
        %314 = vmatprep.subr.bf16.mxu0 0
        %315 = vmatpush1.bf16.msra.mxu0 %v290
        %316 = vmatprep.subr.bf16.mxu0 0
        %317 = vmatpush1.bf16.msra.mxu0 %v291
        %318 = vmatprep.subr.bf16.mxu0 0
        %319 = vmatpush1.bf16.msra.mxu0 %v292
        %320 = vmatprep.subr.bf16.mxu0 0
        %321 = vmatpush1.bf16.msra.mxu0 %v293
        %322 = vmatprep.subr.bf16.mxu0 0
        %323 = vmatpush1.bf16.msra.mxu0 %v294
        %324 = vmatprep.subr.bf16.mxu0 0
        %325 = vmatpush1.bf16.msra.mxu0 %v295
        %326 = vmatprep.subr.bf16.mxu0 0
        %327 = vmatpush1.bf16.msra.mxu0 %v296
        %328 = vmatprep.subr.bf16.mxu0 0
        %329 = vmatpush1.bf16.msra.mxu0 %v297
        %330 = vmatprep.subr.bf16.mxu0 0
        %331 = vmatpush1.bf16.msra.mxu0 %v298
        %332 = vmatprep.subr.bf16.mxu0 0
        %333 = vmatpush1.bf16.msra.mxu0 0
        %334 = vmatprep.subr.bf16.mxu0 0
        %335 = vmatpush1.bf16.msra.mxu0 0
        %336 = vmatprep.subr.bf16.mxu0 0
        %337 = vmatpush1.bf16.msra.mxu0 0
        %338 = vmatprep.subr.bf16.mxu0 0
        %339 = vmatpush1.bf16.msra.mxu0 0
        %340 = vmatprep.subr.bf16.mxu0 0
        %341 = vmatpush1.bf16.msra.mxu0 0
        %342 = vmatprep.subr.bf16.mxu0 0
        %343 = vmatpush1.bf16.msra.mxu0 0
        %344 = vmatprep.mubr.bf16.mxu0 %v310
        %345 = vmatmul.mubr.bf16.gmra.mrb[0].mxu0 %v220
        %v346 = vpop.f32.mrb[0].mxu0
        %v347 = vadd.f32 %v247, %v346
        %v348 = vpop.f32.mrb[0].mxu0
        %v349 = vpop.f32.mrb[0].mxu0
        %v350 = vadd.f32 %v247, %v349
        %v351 = vpop.f32.mrb[0].mxu0
        %352 = vdwg.mxu0
        %v353 = vmax.f32 %v347, 0.0
        %v354 = vmax.f32 %v350, 0.0
        %355 = vst.msk [vmem:[#allocation2 + $0x2] sm:$0xff] %vm175, %v353
        %356 = vst.msk [vmem:[#allocation2 + $0xa] sm:$0xff] %vm175, %v354
        %v357 = vld [vmem:[#allocation2] sm:$0xff]
        %v358 = vld [vmem:[#allocation2 + $0x8] sm:$0xff]
        %v359 = vld [vmem:[#allocation2 + $0x1] sm:$0xff]
        %v360 = vld [vmem:[#allocation2 + $0x9] sm:$0xff]
        %v361 = vld [vmem:[#allocation2 + $0x2] sm:$0xff]
        %v362 = vld [vmem:[#allocation2 + $0xa] sm:$0xff]
        %v363 = vld [vmem:[#allocation2 + $0x3] sm:$0xff]
        %v364 = vld [vmem:[#allocation2 + $0xb] sm:$0xff]
        %v365 = vld [vmem:[#allocation2 + $0x4] sm:$0xff]
        %v366 = vld [vmem:[#allocation2 + $0xc] sm:$0xff]
        %369 = vrot.lane.b32.xlu0 %v359, 32
        %v370 = vpop.permute.xlu0 %369
        %371 = vrot.lane.b32.xlu0 %v360, 32
        %v372 = vpop.permute.xlu0 %371
        %377 = vrot.lane.b32.xlu0 %v361, 64
        %v378 = vpop.permute.xlu0 %377
        %379 = vrot.lane.b32.xlu0 %v362, 64
        %v380 = vpop.permute.xlu0 %379
        %385 = vrot.lane.b32.xlu0 %v363, 96
        %v386 = vpop.permute.xlu0 %385
        %387 = vrot.lane.b32.xlu0 %v364, 96
        %v388 = vpop.permute.xlu0 %387
        %v391 = vsel %vm175, %v357, %v370
        %v392 = vsel %vm175, %v358, %v372
        %v393 = vsel %vm214, %v391, %v378
        %v394 = vsel %vm214, %v392, %v380
        %v395 = vsel %vm217, %v393, %v386
        %v396 = vsel %vm217, %v394, %v388
        %v397 = vpack.c.bf16 %v396, %v395
        %v398 = vpack.c.bf16 %v366, %v365
        %s399 = scalar_lea.vmem %s1, 80
        %v400 = vld [vmem:[%s399] sm:$0xf]
        %v401 = vld [vmem:[%s399 + $0x4] sm:$0xf]
        %v402 = vld [vmem:[%s399 + $0x8] sm:$0xf]
        %v403 = vld [vmem:[%s399 + $0xc] sm:$0xf]
        %v404 = vld [vmem:[%s399 + $0x10] sm:$0xf]
        %v405 = vld [vmem:[%s399 + $0x14] sm:$0xf]
        %v406 = vld [vmem:[%s399 + $0x18] sm:$0xf]
        %v407 = vld [vmem:[%s399 + $0x1c] sm:$0xf]
        %v408 = vld [vmem:[%s399 + $0x20] sm:$0xf]
        %v409 = vld [vmem:[%s399 + $0x24] sm:$0xf]
        %v410 = vld [vmem:[%s399 + $0x28] sm:$0xf]
        %v411 = vld [vmem:[%s399 + $0x2c] sm:$0xf]
        %v412 = vld [vmem:[%s399 + $0x30] sm:$0xf]
        %v413 = vld [vmem:[%s399 + $0x34] sm:$0xf]
        %v414 = vld [vmem:[%s399 + $0x38] sm:$0xf]
        %v415 = vld [vmem:[%s399 + $0x3c] sm:$0xf]
        %v416 = vld [vmem:[%s399 + $0x40] sm:$0xf]
        %v417 = vld [vmem:[%s399 + $0x44] sm:$0xf]
        %v418 = vld [vmem:[%s399 + $0x48] sm:$0xf]
        %v419 = vld [vmem:[%s399 + $0x4c] sm:$0xf]
        %s420 = scalar_lea.vmem %s2, 1
        %v421 = vld [vmem:[%s420] sm:$0x1]
        %v423 = vlaneseq
        %v424 = vshrl.u32 %v423, 7
        %v425 = vsub.s32 0, %v424
        %v426 = vrot.slane %v421, %v425
        %v448 = vunpack.c.l.b16 %v400
        %v449 = vunpack.c.l.b16 %v401
        %v450 = vunpack.c.l.b16 %v402
        %v451 = vunpack.c.l.b16 %v403
        %v452 = vunpack.c.l.b16 %v404
        %v453 = vunpack.c.l.b16 %v405
        %v454 = vunpack.c.l.b16 %v406
        %v455 = vunpack.c.l.b16 %v407
        %v456 = vunpack.c.l.b16 %v408
        %v457 = vunpack.c.l.b16 %v409
        %v458 = vunpack.c.l.b16 %v410
        %v459 = vunpack.c.l.b16 %v411
        %v460 = vunpack.c.l.b16 %v412
        %v461 = vunpack.c.l.b16 %v413
        %v462 = vunpack.c.l.b16 %v414
        %v463 = vunpack.c.l.b16 %v415
        %v464 = vunpack.c.l.b16 %v416
        %v465 = vunpack.c.l.b16 %v417
        %v466 = vunpack.c.l.b16 %v418
        %v467 = vunpack.c.l.b16 %v419
        %v468 = vpack.c.b16 %v449, %v448
        %v469 = vpack.c.b16 %v451, %v450
        %v470 = vpack.c.b16 %v453, %v452
        %v471 = vpack.c.b16 %v455, %v454
        %v472 = vpack.c.b16 %v457, %v456
        %v473 = vpack.c.b16 %v459, %v458
        %v474 = vpack.c.b16 %v461, %v460
        %v475 = vpack.c.b16 %v463, %v462
        %v476 = vpack.c.b16 %v465, %v464
        %v477 = vpack.c.b16 %v467, %v466
        %v489 = vsel %vm175, %v398, 0
        %491 = vmatprep.subr.bf16.mxu0 0
        %492 = vmatpush1.bf16.msra.mxu0 %v468
        %493 = vmatprep.subr.bf16.mxu0 0
        %494 = vmatpush1.bf16.msra.mxu0 %v469
        %495 = vmatprep.subr.bf16.mxu0 0
        %496 = vmatpush1.bf16.msra.mxu0 %v470
        %497 = vmatprep.subr.bf16.mxu0 0
        %498 = vmatpush1.bf16.msra.mxu0 %v471
        %499 = vmatprep.subr.bf16.mxu0 0
        %500 = vmatpush1.bf16.msra.mxu0 %v472
        %501 = vmatprep.subr.bf16.mxu0 0
        %502 = vmatpush1.bf16.msra.mxu0 %v473
        %503 = vmatprep.subr.bf16.mxu0 0
        %504 = vmatpush1.bf16.msra.mxu0 %v474
        %505 = vmatprep.subr.bf16.mxu0 0
        %506 = vmatpush1.bf16.msra.mxu0 %v475
        %507 = vmatprep.subr.bf16.mxu0 0
        %508 = vmatpush1.bf16.msra.mxu0 %v476
        %509 = vmatprep.subr.bf16.mxu0 0
        %510 = vmatpush1.bf16.msra.mxu0 %v477
        %511 = vmatprep.subr.bf16.mxu0 0
        %512 = vmatpush1.bf16.msra.mxu0 0
        %513 = vmatprep.subr.bf16.mxu0 0
        %514 = vmatpush1.bf16.msra.mxu0 0
        %515 = vmatprep.subr.bf16.mxu0 0
        %516 = vmatpush1.bf16.msra.mxu0 0
        %517 = vmatprep.subr.bf16.mxu0 0
        %518 = vmatpush1.bf16.msra.mxu0 0
        %519 = vmatprep.subr.bf16.mxu0 0
        %520 = vmatpush1.bf16.msra.mxu0 0
        %521 = vmatprep.subr.bf16.mxu0 0
        %522 = vmatpush1.bf16.msra.mxu0 0
        %523 = vmatprep.mubr.bf16.mxu0 %v489
        %524 = vmatmul.mubr.bf16.gmra.mrb[0].mxu0 %v397
        %v525 = vpop.f32.mrb[0].mxu0
        %v526 = vadd.f32 %v426, %v525
        %v527 = vpop.f32.mrb[0].mxu0
        %v528 = vpop.f32.mrb[0].mxu0
        %v529 = vadd.f32 %v426, %v528
        %v530 = vpop.f32.mrb[0].mxu0
        %531 = vdwg.mxu0
        %v532 = vmax.f32 %v526, 0.0
        %v533 = vmax.f32 %v529, 0.0
        %534 = vst.msk [vmem:[#allocation2 + $0x2] sm:$0xff] %vm175, %v532
        %535 = vst.msk [vmem:[#allocation2 + $0xa] sm:$0xff] %vm175, %v533
        %v536 = vld [vmem:[#allocation2] sm:$0xff]
        %v537 = vld [vmem:[#allocation2 + $0x8] sm:$0xff]
        %v538 = vld [vmem:[#allocation2 + $0x1] sm:$0xff]
        %v539 = vld [vmem:[#allocation2 + $0x9] sm:$0xff]
        %v540 = vld [vmem:[#allocation2 + $0x2] sm:$0xff]
        %v541 = vld [vmem:[#allocation2 + $0xa] sm:$0xff]
        %v542 = vld [vmem:[#allocation2 + $0x3] sm:$0xff]
        %v543 = vld [vmem:[#allocation2 + $0xb] sm:$0xff]
        %v544 = vld [vmem:[#allocation2 + $0x4] sm:$0xff]
        %v545 = vld [vmem:[#allocation2 + $0xc] sm:$0xff]
        %548 = vrot.lane.b32.xlu0 %v538, 32
        %v549 = vpop.permute.xlu0 %548
        %550 = vrot.lane.b32.xlu0 %v539, 32
        %v551 = vpop.permute.xlu0 %550
        %556 = vrot.lane.b32.xlu0 %v540, 64
        %v557 = vpop.permute.xlu0 %556
        %558 = vrot.lane.b32.xlu0 %v541, 64
        %v559 = vpop.permute.xlu0 %558
        %564 = vrot.lane.b32.xlu0 %v542, 96
        %v565 = vpop.permute.xlu0 %564
        %566 = vrot.lane.b32.xlu0 %v543, 96
        %v567 = vpop.permute.xlu0 %566
        %v570 = vsel %vm175, %v536, %v549
        %v571 = vsel %vm175, %v537, %v551
        %v572 = vsel %vm214, %v570, %v557
        %v573 = vsel %vm214, %v571, %v559
        %v574 = vsel %vm217, %v572, %v565
        %v575 = vsel %vm217, %v573, %v567
        %v576 = vpack.c.bf16 %v575, %v574
        %v577 = vpack.c.bf16 %v545, %v544
        %s578 = scalar_lea.vmem %s1, 160
        %v579 = vld [vmem:[%s578] sm:$0xf]
        %v580 = vld [vmem:[%s578 + $0x4] sm:$0xf]
        %v581 = vld [vmem:[%s578 + $0x8] sm:$0xf]
        %v582 = vld [vmem:[%s578 + $0xc] sm:$0xf]
        %v583 = vld [vmem:[%s578 + $0x10] sm:$0xf]
        %v584 = vld [vmem:[%s578 + $0x14] sm:$0xf]
        %v585 = vld [vmem:[%s578 + $0x18] sm:$0xf]
        %v586 = vld [vmem:[%s578 + $0x1c] sm:$0xf]
        %v587 = vld [vmem:[%s578 + $0x20] sm:$0xf]
        %v588 = vld [vmem:[%s578 + $0x24] sm:$0xf]
        %v589 = vld [vmem:[%s578 + $0x28] sm:$0xf]
        %v590 = vld [vmem:[%s578 + $0x2c] sm:$0xf]
        %v591 = vld [vmem:[%s578 + $0x30] sm:$0xf]
        %v592 = vld [vmem:[%s578 + $0x34] sm:$0xf]
        %v593 = vld [vmem:[%s578 + $0x38] sm:$0xf]
        %v594 = vld [vmem:[%s578 + $0x3c] sm:$0xf]
        %v595 = vld [vmem:[%s578 + $0x40] sm:$0xf]
        %v596 = vld [vmem:[%s578 + $0x44] sm:$0xf]
        %v597 = vld [vmem:[%s578 + $0x48] sm:$0xf]
        %v598 = vld [vmem:[%s578 + $0x4c] sm:$0xf]
        %s599 = scalar_lea.vmem %s2, 2
        %v600 = vld [vmem:[%s599] sm:$0x1]
        %v602 = vlaneseq
        %v603 = vshrl.u32 %v602, 7
        %v604 = vsub.s32 0, %v603
        %v605 = vrot.slane %v600, %v604
        %v627 = vunpack.c.l.b16 %v579
        %v628 = vunpack.c.l.b16 %v580
        %v629 = vunpack.c.l.b16 %v581
        %v630 = vunpack.c.l.b16 %v582
        %v631 = vunpack.c.l.b16 %v583
        %v632 = vunpack.c.l.b16 %v584
        %v633 = vunpack.c.l.b16 %v585
        %v634 = vunpack.c.l.b16 %v586
        %v635 = vunpack.c.l.b16 %v587
        %v636 = vunpack.c.l.b16 %v588
        %v637 = vunpack.c.l.b16 %v589
        %v638 = vunpack.c.l.b16 %v590
        %v639 = vunpack.c.l.b16 %v591
        %v640 = vunpack.c.l.b16 %v592
        %v641 = vunpack.c.l.b16 %v593
        %v642 = vunpack.c.l.b16 %v594
        %v643 = vunpack.c.l.b16 %v595
        %v644 = vunpack.c.l.b16 %v596
        %v645 = vunpack.c.l.b16 %v597
        %v646 = vunpack.c.l.b16 %v598
        %v647 = vpack.c.b16 %v628, %v627
        %v648 = vpack.c.b16 %v630, %v629
        %v649 = vpack.c.b16 %v632, %v631
        %v650 = vpack.c.b16 %v634, %v633
        %v651 = vpack.c.b16 %v636, %v635
        %v652 = vpack.c.b16 %v638, %v637
        %v653 = vpack.c.b16 %v640, %v639
        %v654 = vpack.c.b16 %v642, %v641
        %v655 = vpack.c.b16 %v644, %v643
        %v656 = vpack.c.b16 %v646, %v645
        %v668 = vsel %vm175, %v577, 0
        %670 = vmatprep.subr.bf16.mxu0 0
        %671 = vmatpush1.bf16.msra.mxu0 %v647
        %672 = vmatprep.subr.bf16.mxu0 0
        %673 = vmatpush1.bf16.msra.mxu0 %v648
        %674 = vmatprep.subr.bf16.mxu0 0
        %675 = vmatpush1.bf16.msra.mxu0 %v649
        %676 = vmatprep.subr.bf16.mxu0 0
        %677 = vmatpush1.bf16.msra.mxu0 %v650
        %678 = vmatprep.subr.bf16.mxu0 0
        %679 = vmatpush1.bf16.msra.mxu0 %v651
        %680 = vmatprep.subr.bf16.mxu0 0
        %681 = vmatpush1.bf16.msra.mxu0 %v652
        %682 = vmatprep.subr.bf16.mxu0 0
        %683 = vmatpush1.bf16.msra.mxu0 %v653
        %684 = vmatprep.subr.bf16.mxu0 0
        %685 = vmatpush1.bf16.msra.mxu0 %v654
        %686 = vmatprep.subr.bf16.mxu0 0
        %687 = vmatpush1.bf16.msra.mxu0 %v655
        %688 = vmatprep.subr.bf16.mxu0 0
        %689 = vmatpush1.bf16.msra.mxu0 %v656
        %690 = vmatprep.subr.bf16.mxu0 0
        %691 = vmatpush1.bf16.msra.mxu0 0
        %692 = vmatprep.subr.bf16.mxu0 0
        %693 = vmatpush1.bf16.msra.mxu0 0
        %694 = vmatprep.subr.bf16.mxu0 0
        %695 = vmatpush1.bf16.msra.mxu0 0
        %696 = vmatprep.subr.bf16.mxu0 0
        %697 = vmatpush1.bf16.msra.mxu0 0
        %698 = vmatprep.subr.bf16.mxu0 0
        %699 = vmatpush1.bf16.msra.mxu0 0
        %700 = vmatprep.subr.bf16.mxu0 0
        %701 = vmatpush1.bf16.msra.mxu0 0
        %702 = vmatprep.mubr.bf16.mxu0 %v668
        %703 = vmatmul.mubr.bf16.gmra.mrb[0].mxu0 %v576
        %v704 = vpop.f32.mrb[0].mxu0
        %v705 = vadd.f32 %v605, %v704
        %v706 = vpop.f32.mrb[0].mxu0
        %v707 = vpop.f32.mrb[0].mxu0
        %v708 = vadd.f32 %v605, %v707
        %v709 = vpop.f32.mrb[0].mxu0
        %710 = vdwg.mxu0
        %v711 = vmax.f32 %v705, 0.0
        %v712 = vmax.f32 %v708, 0.0
        %v713 = vpack.c.bf16 %v712, %v711
        %v715 = vunpack.c.l.b16 %v713
        %v716 = vunpack.c.h.b16 %v713
        %v717 = vpack.c.b16 %v715, %v715
        %v718 = vpack.c.b16 %v716, %v716
        %vm721 = vcmask 257024
        %722 = vst.msk [vmem:[%s163] sm:$0xf] %vm721, %v717
        %723 = vst.msk [vmem:[%s163 + $0x4] sm:$0xf] %vm721, %v718
        %s724 = sand.u32 %s93, 1
        %s725 = scalar_lea.sflag [#allocation4], %s724
        %s726 = sand.u32 %s93, 1
        %s727 = smul.addr %s726, 8
        %s728 = scalar_lea.vmem [#allocation3], %s727
        // Predicated region
        $region33: #{tpu_custom_call.1} parent=31 // pred_check
          %p729 = pneg %p103
        $region34: #{tpu_custom_call.1} parent=31 // pred_check_branch
          %731 = sbr.rel (%p729) target = $region36
        $region35: #{tpu_custom_call.1} parent=31 // pred_region
          %s733 = ssub.s32 128, 128
          %734 = vsyncadd %s725, %s733
          %s735 = smul.addr %s17, 2
          %s736 = smul.addr %s735, 64
          %s737 = scalar_lea.hbm %s3, %s736
          %s738 = sshll.u32 %s728, 4
          %s739 = int_to_ptr.vmem [resolvable:$true] %s738
          %744 = dma.vmem_to_hbm [thread:$0]  %s739, 128, %s737, %s725, 64, 64, 4
        $region36: #{tpu_custom_call.1} parent=31 // pred_fallthru
          _
      $region32: #{tpu_custom_call.1} parent=5 // pred_fallthru
        _
      %p745 = scmp.le.s32.totalorder 2, %s12
      // Predicated region
      $region37: #{tpu_custom_call.1} parent=5 // pred_check
        %p746 = pneg %p745
      $region38: #{tpu_custom_call.1} parent=5 // pred_check_branch
        %748 = sbr.rel (%p746) target = $region40
      $region39: #{tpu_custom_call.1} parent=5 // pred_region
        %s749 = ssub.s32 %s12, 2
        // Predicated region
        $region41: #{tpu_custom_call.1} parent=39 // pred_check
          %p750 = pneg %p109
        $region42: #{tpu_custom_call.1} parent=39 // pred_check_branch
          %752 = sbr.rel (%p750) target = $region44
        $region43: #{tpu_custom_call.1} parent=39 // pred_region
          %s753 = sand.u32 %s94, 1
          %s754 = scalar_lea.sflag [#allocation4], %s753
          %s755 = sand.u32 %s94, 1
          %s756 = smul.addr %s755, 8
          %s757 = scalar_lea.vmem [#allocation3], %s756
          %758 = dma.done %s754, 128
        $region44: #{tpu_custom_call.1} parent=39 // pred_fallthru
          _
      $region40: #{tpu_custom_call.1} parent=5 // pred_fallthru
        _
    $region6: #{tpu_custom_call.1} parent=1 // loop_footer
      %s16 = sadd.s32 1, %s12
    $region7: #{tpu_custom_call.1} parent=1 // loop_footer_branch
      %11 = sbr.rel target = $region3
    $region8: #{tpu_custom_call.1} parent=1 // loop_exit
      _
    %759 = vsyncpa [#allocation4], 1
    %s760 = scalar_lea.sflag [#allocation4], 1
    %761 = vsyncpa %s760, 1

</llo_original>
